<compile_context>
chip_gen: v7x
topology: tpu7x:2x2x1
jax: 0.10.0
libtpu: 0.0.40
codegen_flags: <defaults>
</compile_context>

<pallas_src>
import functools
import math

import jax
import jax.numpy as jnp
from jax.experimental import pallas as pl
from jax.experimental.pallas import tpu as pltpu


_LANES = 128                      # TPU vreg lane width
_MAX_ROW_TILE = 8192              # max packed rows per grid step
_MIN_ROW_TILE = 2048              # keep per-step output >= ~1 MiB (amortize ~0.35us/step)
_MIN_STEPS = 8                    # pipeline depth / v7x core balance for large R
_MAX_PACK_K = 64                  # keep the block-diag contraction shallow (store-bound)
_VMEM_LIMIT = 32 * 1024 * 1024    # raise v5e's 16 MiB scoped default; fine on v6e/v7x
_VMEM_BUDGET = 20 * 1024 * 1024   # budget for double-buffered in/out blocks


def _round_up(x, m):
    return ((x + m - 1) // m) * m


def _rows_kernel(x_ref, w_ref, b_ref, o_ref):
    # x_ref: (TM, K)  packed input rows      (K = pack * C, shallow: 8-64)
    # w_ref: (K, N)   block-diagonal weight  (N = pack * E, lane-dense)
    # b_ref: (1, N)   tiled bias
    # o_ref: (TM, N)  lane-dense output tile
    o_ref[...] = (
        jnp.dot(x_ref[...], w_ref[...], preferred_element_type=jnp.float32)
        + b_ref[...]
    ).astype(o_ref.dtype)


def _pick_row_tile(R, K, N, itemsize):
    """Largest packed-row tile that fits the VMEM budget, with pipelining floor."""
    k_pad = _round_up(max(K, _LANES), _LANES)       # (tm, K) block lane-pads to 128
    per_row = 2 * (k_pad + N) * itemsize            # double-buffered input + output
    tm_cap = int(_VMEM_BUDGET // per_row)
    tm_cap = max(8, min(_MAX_ROW_TILE, (tm_cap // 8) * 8))
    if R <= tm_cap:
        return R                                    # single step covers everything
    # Large problem: aim for >= _MIN_STEPS grid steps (DMA overlap, v7x dual-TC
    # balance) but never shrink tiles below _MIN_ROW_TILE rows.
    target = _round_up((R + _MIN_STEPS - 1) // _MIN_STEPS, 8)
    return min(tm_cap, max(_MIN_ROW_TILE, target))


@functools.partial(jax.jit, static_argnames=("force_pallas", "max_row_tile"))
def graph_embedding(inputs, weight, bias, *, force_pallas=False, max_row_tile=None):
    """GraphEmbedding forward: (B, C, S) x (E, C), (E,) -> (B, S, E)."""
    B, C, S = inputs.shape
    E = weight.shape[0]
    rows = B * S
    dtype = inputs.dtype
    itemsize = jnp.dtype(dtype).itemsize

    # Small-problem fast path: pallas_call fixed cost dominates below ~4K rows.
    if not force_pallas and rows < 4096:
        return jnp.einsum("bcs,ec->bse", inputs, weight) + bias[None, None, :]

    # ---- wrapper-side row flattening (narrow input, cheap vs. E-wide output) --
    x_rows = jnp.transpose(inputs, (0, 2, 1)).reshape(rows, C)

    # ---- lane-dense packing: pack = 128 / gcd(E, 128)  (N = lcm(E, 128)) ------
    pack = _LANES // math.gcd(E, _LANES)
    if pack * C > _MAX_PACK_K:
        pack = 1        # awkward E: stay shallow-K, accept masked stores

    rows_pad = _round_up(rows, pack)
    if rows_pad != rows:
        # Pad with zero rows (at most pack-1) rather than losing lane-dense stores.
        x_rows = jnp.concatenate(
            [x_rows, jnp.zeros((rows_pad - rows, C), dtype)], axis=0)

    R = rows_pad // pack
    K = pack * C
    N = pack * E

    x_packed = x_rows.reshape(R, K)

    w_t = weight.astype(dtype).T                    # (C, E)
    if pack > 1:
        # Block-diagonal replication: W_bd[p*C + c, p*E + e] = W[e, c].
        eye = jnp.eye(pack, dtype=w_t.dtype)
        w_bd = jnp.einsum("pq,ce->pcqe", eye, w_t).reshape(K, N)
        b_row = jnp.tile(bias.astype(dtype), pack).reshape(1, N)
    else:
        w_bd = w_t
        b_row = bias.astype(dtype).reshape(1, N)

    # ---- tile selection --------------------------------------------------------
    tm = _pick_row_tile(R, K, N, itemsize)
    if max_row_tile is not None:
        tm = min(tm, int(max_row_tile))
    if tm >= R:
        tm = R                                      # block == full array: always legal
    else:
        tm = max(8, (tm // 8) * 8)                  # (8,128) sublane constraint
    grid = (pl.cdiv(R, tm),)

    out_packed = pl.pallas_call(
        _rows_kernel,
        out_shape=jax.ShapeDtypeStruct((R, N), dtype),
        grid_spec=pltpu.PrefetchScalarGridSpec(
            num_scalar_prefetch=0,
            grid=grid,
            in_specs=[
                pl.BlockSpec((tm, K), lambda i: (i, 0)),   # packed rows (streamed)
                pl.BlockSpec((K, N), lambda i: (0, 0)),    # weight (resident)
                pl.BlockSpec((1, N), lambda i: (0, 0)),    # bias   (resident)
            ],
            out_specs=pl.BlockSpec((tm, N), lambda i: (i, 0)),
        ),
        compiler_params=pltpu.CompilerParams(
            dimension_semantics=("parallel",),      # v7x: shard row tiles over 2 TCs
            vmem_limit_bytes=_VMEM_LIMIT,           # so v5e's 16 MiB default isn't the cap
        ),
        cost_estimate=pl.CostEstimate(
            flops=2 * R * K * N,
            transcendentals=0,
            bytes_accessed=itemsize * (R * K + K * N + N + R * N),
        ),
    )(x_packed, w_bd, b_row)

    # (R, pack*E) row-major is byte-identical to (rows_pad, E) row-major -> free.
    out_flat = out_packed.reshape(rows_pad, E)
    if rows_pad != rows:
        out_flat = out_flat[:rows]
    return out_flat.reshape(B, S, E)


def _reference(inputs, weight, bias):
    # Pure-JAX reference of Conv1d(k=1) applied channel-wise, then transpose.
    return jnp.einsum("bcs,ec->bse", inputs, weight) + bias[None, None, :]


def _make_params(key, input_size, embedding_size):
    k_w, k_b = jax.random.split(key)
    fan_in, fan_out = input_size, embedding_size
    limit = (6.0 / (fan_in + fan_out)) ** 0.5                 # xavier_uniform_
    weight = jax.random.uniform(
        k_w, (embedding_size, input_size), jnp.float32, -limit, limit)
    b_lim = 1.0 / (fan_in ** 0.5)                             # Conv1d default bias init
    bias = jax.random.uniform(
        k_b, (embedding_size,), jnp.float32, -b_lim, b_lim)
    return weight, bias


if __name__ == "__main__":
    key = jax.random.PRNGKey(0)

    # (batch, input_size, seq_len, embedding_size, max_row_tile):
    #   1) tiny module-consistent TSP demo shape (coords -> input_size=2)
    #   2) multi-step "parallel" grid (R=256, tm capped at 64 -> 4 steps)
    #   3) larger single-tile packed path
    #   4) rows % pack != 0 -> zero-pad + slice path
    #   5) E=48 -> gcd packing (pack=8, N=384) keeps stores lane-dense
    cases = [
        (2, 2, 8, 32, None),
        (2, 2, 512, 32, 64),
        (2, 2, 4096, 32, None),
        (3, 2, 10, 32, None),
        (2, 2, 64, 48, None),
    ]
    for idx, (batch, input_size, seq_len, embedding_size, mrt) in enumerate(cases):
        key, k_p, k_x = jax.random.split(key, 3)
        weight, bias = _make_params(k_p, input_size, embedding_size)
        inputs = jax.random.uniform(
            k_x, (batch, input_size, seq_len), jnp.float32)

        out = graph_embedding(inputs, weight, bias,
                              force_pallas=True, max_row_tile=mrt)
        out = jax.block_until_ready(out)

        ref = _reference(inputs, weight, bias)
        assert out.shape == (batch, seq_len, embedding_size), out.shape
        assert jnp.allclose(out, ref, atol=1e-5, rtol=1e-5), f"mismatch case {idx}"

    print("KERNEL_OK")
</pallas_src>

<mosaic_0001>
module attributes {stable_mosaic.version = 11 : i64} {
  func.func @_rows_kernel(%arg0: i32, %arg1: memref<4x8xf32, #tpu.memory_space<vmem>>, %arg2: memref<8x128xf32, #tpu.memory_space<vmem>>, %arg3: memref<1x128xf32, #tpu.memory_space<vmem>>, %arg4: memref<4x128xf32, #tpu.memory_space<vmem>>) attributes {dimension_semantics = [#tpu.dimension_semantics<parallel>], iteration_bounds = array<i64: 1>, scalar_prefetch = 0 : i64, scratch_operands = 0 : i64, tpu.core_type = #tpu.core_type<tc>, window_params = [{transform_indices = @transform_0, window_bounds = array<i64: 4, 8>}, {pipeline_mode = #tpu.pipeline_mode<synchronous>, transform_indices = @transform_1, window_bounds = array<i64: 8, 128>}, {pipeline_mode = #tpu.pipeline_mode<synchronous>, transform_indices = @transform_2, window_bounds = array<i64: 1, 128>}, {transform_indices = @transform_3, window_bounds = array<i64: 4, 128>}]} {
    %c0 = arith.constant 0 : index
    %c0_0 = arith.constant 0 : index
    %0 = vector.load %arg1[%c0, %c0_0] : memref<4x8xf32, #tpu.memory_space<vmem>>, vector<4x8xf32>
    %c0_1 = arith.constant 0 : index
    %c0_2 = arith.constant 0 : index
    %1 = vector.load %arg2[%c0_1, %c0_2] : memref<8x128xf32, #tpu.memory_space<vmem>>, vector<8x128xf32>
    %cst = arith.constant dense<0.000000e+00> : vector<4x128xf32>
    %2 = tpu.matmul %0, %1, %cst {dimension_numbers = #tpu.dot_dimension_numbers<[1], [0], [0], [1], [0, 0, 1, 1], [], []>} : vector<4x8xf32>, vector<8x128xf32>, vector<4x128xf32> -> vector<4x128xf32>
    %c0_3 = arith.constant 0 : index
    %c0_4 = arith.constant 0 : index
    %3 = vector.load %arg3[%c0_3, %c0_4] : memref<1x128xf32, #tpu.memory_space<vmem>>, vector<1x128xf32>
    %4 = vector.broadcast %3 : vector<1x128xf32> to vector<4x128xf32>
    %5 = arith.addf %2, %4 : vector<4x128xf32>
    %c0_5 = arith.constant 0 : index
    %c0_6 = arith.constant 0 : index
    %6 = vector.load %arg4[%c0_5, %c0_6] : memref<4x128xf32, #tpu.memory_space<vmem>>, vector<4x128xf32>
    tpu.vector_store %arg4[%c0_5, %c0_6], %5 {strides = array<i32>} : memref<4x128xf32, #tpu.memory_space<vmem>>, vector<4x128xf32>,
    return
  }
  func.func @transform_0(%arg0: i32) -> (i32, i32) {
    %c0_i32 = arith.constant 0 : i32
    %c0_i32_0 = arith.constant 0 : i32
    return %arg0, %c0_i32 : i32, i32
  }
  func.func @transform_1(%arg0: i32) -> (i32, i32) {
    %c0_i32 = arith.constant 0 : i32
    %c0_i32_0 = arith.constant 0 : i32
    %c0_i32_1 = arith.constant 0 : i32
    return %c0_i32, %c0_i32_0 : i32, i32
  }
  func.func @transform_2(%arg0: i32) -> (i32, i32) {
    %c0_i32 = arith.constant 0 : i32
    %c0_i32_0 = arith.constant 0 : i32
    %c0_i32_1 = arith.constant 0 : i32
    return %c0_i32, %c0_i32_0 : i32, i32
  }
  func.func @transform_3(%arg0: i32) -> (i32, i32) {
    %c0_i32 = arith.constant 0 : i32
    %c0_i32_0 = arith.constant 0 : i32
    return %arg0, %c0_i32 : i32, i32
  }
}

</mosaic_0001>

<llo_original>
// kernel: tile.9
$region0: #{tile.9}
  %s0 = inlined_call_operand.vmem [shape: f32[4,32], index: 0, kind: input, shape index: {}]
  %s1 = inlined_call_operand.vmem [shape: f32[1,128], index: 1, kind: output, shape index: {}]
  $region1: #{tile.9} parent=0
    #allocation0 [shape = 'u8[4096]{0}', space=vmem, size = 0x1000, scoped, tag = 'scoped mem for output reshape']
    #allocation1 [shape = 'u8[4096]{0}', space=vmem, size = 0x1000, scoped, tag = 'scoped mem for input reshape']
    %s3 = sshllo.u32 0, 4
    %v4 = vld [vmem:[%s0] sm:%s3]
    %5 = vst [vmem:[#allocation1] sm:%s3] %v4
    %v6 = vld [vmem:[#allocation1] sm:$0x1]
    %vm7 = vcmask 261120
    %8 = vst.msk [vmem:[#allocation0] sm:$0x1] %vm7, %v6
    %s9 = scalar_lea.vmem [#allocation1], 3
    %v10 = vld [vmem:[%s9] sm:$0x1]
    %11 = vrot.lane.b32.xlu0 %v10, 96
    %v12 = vpop.permute.xlu0 %11
    %vm13 = vcmask 1048320
    %14 = vst.msk [vmem:[#allocation0] sm:$0x1] %vm13, %v12
    %s15 = scalar_lea.vmem [#allocation1], 2
    %v16 = vld [vmem:[%s15] sm:$0x1]
    %17 = vrot.lane.b32.xlu0 %v16, 64
    %v18 = vpop.permute.xlu0 %17
    %vm19 = vcmask 785920
    %20 = vst.msk [vmem:[#allocation0] sm:$0x1] %vm19, %v18
    %s21 = scalar_lea.vmem [#allocation1], 1
    %v22 = vld [vmem:[%s21] sm:$0x1]
    %23 = vrot.lane.b32.xlu0 %v22, 32
    %v24 = vpop.permute.xlu0 %23
    %vm25 = vcmask 523520
    %26 = vst.msk [vmem:[#allocation0] sm:$0x1] %vm25, %v24
    %s28 = sshllo.u32 0, 1
    %v30 = vld [vmem:[#allocation0] sm:%s28]
    %s31 = sshllo.u32 0, 1
    %32 = vst [vmem:[%s1] sm:%s31] %v30

// kernel: tile.8
$region0: #{tile.8}
  #allocation0 [shape = 's32[1]{0}', space=sflag, size = 0x4, scoped, tag = 'scoped memory for tile.8']
  %s0 = inlined_call_operand.vmem [shape: f32[32], index: 0, kind: input, shape index: {}]
  %s1 = inlined_call_operand.vmem [shape: f32[4,32], index: 1, kind: output, shape index: {}]
  // Predicated region
  $region2: #{tile.8} parent=0 // pred_check
    _
  $region3: #{tile.8} parent=0 // pred_check_branch
    %3 = sbr.rel (0) target = $region5
  $region4: #{tile.8} parent=0 // pred_region
    _
  $region5: #{tile.8} parent=0 // pred_fallthru
    _
  %v4 = vld [vmem:[%s0] ss:$0 sm:$0xff]
  %5 = vst [vmem:[%s1] sm:$0xf] %v4

// kernel: graph_embedding.1
$region0: #{graph_embedding.1}
  #allocation0 [shape = 'u32[]', space=smem, size = 0x4, offset = 0x4, fixed_abs, tag = 'smem constant byte address 0x4 - core index']
  #allocation1 [shape = 'u32[144,128]{1,0:T(1,128)}', space=vmem, size = 0x12000, scoped, tag = 'internal scratch']
  %s0 = inlined_call_operand.vmem [shape: f32[4,8], index: 0, kind: input, shape index: {}]
  %s1 = inlined_call_operand.vmem [shape: f32[8,128], index: 1, kind: input, shape index: {}]
  %s2 = inlined_call_operand.vmem [shape: f32[1,128], index: 2, kind: input, shape index: {}]
  %s3 = inlined_call_operand.vmem [shape: f32[4,128], index: 3, kind: output, shape index: {}]
  %s4 = sld [smem:[#allocation0]]
  $region22: #{graph_embedding.1} parent=0
    _
  %s6 = ssub.s32 1, %s4
  %s7 = scalar_select 0, %s6, %s4
  // Predicated region
  $region2: #{graph_embedding.1} parent=0 // pred_check
    _
  $region3: #{graph_embedding.1} parent=0 // pred_check_branch
    %9 = sbr.rel (0) target = $region5
  $region4: #{graph_embedding.1} parent=0 // pred_region
    _
  $region5: #{graph_embedding.1} parent=0 // pred_fallthru
    _
  // Predicated region
  $region6: #{graph_embedding.1} parent=0 // pred_check
    _
  $region7: #{graph_embedding.1} parent=0 // pred_check_branch
    %11 = sbr.rel (0) target = $region9
  $region8: #{graph_embedding.1} parent=0 // pred_region
    _
  $region9: #{graph_embedding.1} parent=0 // pred_fallthru
    _
  // Predicated region
  $region10: #{graph_embedding.1} parent=0 // pred_check
    _
  $region11: #{graph_embedding.1} parent=0 // pred_check_branch
    %13 = sbr.rel (0) target = $region13
  $region12: #{graph_embedding.1} parent=0 // pred_region
    _
  $region13: #{graph_embedding.1} parent=0 // pred_fallthru
    _
  %v14 = vld [vmem:[%s0] sm:$0xf]
  %v15 = vld [vmem:[%s1] sm:$0xff]
  %v16 = vld [vmem:[%s2] sm:$0x1]
  %v18 = vlaneseq
  %v19 = vshrl.u32 %v18, 7
  %v20 = vsub.s32 0, %v19
  %v21 = vrot.slane %v16, %v20
  %vm23 = vcmask 64512
  %v25 = vsel %vm23, %v14, 0
  %27 = vmatprep.subr.mxu0 0.0
  %28 = vmatpush1.msra.mxu0 %v15
  %29 = vmatprep.subr.mxu0 0.0
  %30 = vmatpush1.msra.mxu0 0.0
  %31 = vmatprep.subr.mxu0 0.0
  %32 = vmatpush1.msra.mxu0 0.0
  %33 = vmatprep.subr.mxu0 0.0
  %34 = vmatpush1.msra.mxu0 0.0
  %35 = vmatprep.subr.mxu0 0.0
  %36 = vmatpush1.msra.mxu0 0.0
  %37 = vmatprep.subr.mxu0 0.0
  %38 = vmatpush1.msra.mxu0 0.0
  %39 = vmatprep.subr.mxu0 0.0
  %40 = vmatpush1.msra.mxu0 0.0
  %41 = vmatprep.subr.mxu0 0.0
  %42 = vmatpush1.msra.mxu0 0.0
  %43 = vmatprep.subr.mxu0 0.0
  %44 = vmatpush1.msra.mxu0 0.0
  %45 = vmatprep.subr.mxu0 0.0
  %46 = vmatpush1.msra.mxu0 0.0
  %47 = vmatprep.subr.mxu0 0.0
  %48 = vmatpush1.msra.mxu0 0.0
  %49 = vmatprep.subr.mxu0 0.0
  %50 = vmatpush1.msra.mxu0 0.0
  %51 = vmatprep.subr.mxu0 0.0
  %52 = vmatpush1.msra.mxu0 0.0
  %53 = vmatprep.subr.mxu0 0.0
  %54 = vmatpush1.msra.mxu0 0.0
  %55 = vmatprep.subr.mxu0 0.0
  %56 = vmatpush1.msra.mxu0 0.0
  %57 = vmatprep.subr.mxu0 0.0
  %58 = vmatpush1.msra.mxu0 0.0
  %59 = vmatprep.subr.mxu0 0.0
  %60 = vmatpush1.msra.mxu0 0.0
  %61 = vmatprep.subr.mxu0 0.0
  %62 = vmatpush1.msra.mxu0 0.0
  %63 = vmatprep.subr.mxu0 0.0
  %64 = vmatpush1.msra.mxu0 0.0
  %65 = vmatprep.subr.mxu0 0.0
  %66 = vmatpush1.msra.mxu0 0.0
  %67 = vmatprep.subr.mxu0 0.0
  %68 = vmatpush1.msra.mxu0 0.0
  %69 = vmatprep.subr.mxu0 0.0
  %70 = vmatpush1.msra.mxu0 0.0
  %71 = vmatprep.subr.mxu0 0.0
  %72 = vmatpush1.msra.mxu0 0.0
  %73 = vmatprep.subr.mxu0 0.0
  %74 = vmatpush1.msra.mxu0 0.0
  %75 = vmatprep.subr.mxu0 0.0
  %76 = vmatpush1.msra.mxu0 0.0
  %77 = vmatprep.subr.mxu0 0.0
  %78 = vmatpush1.msra.mxu0 0.0
  %79 = vmatprep.subr.mxu0 0.0
  %80 = vmatpush1.msra.mxu0 0.0
  %81 = vmatprep.subr.mxu0 0.0
  %82 = vmatpush1.msra.mxu0 0.0
  %83 = vmatprep.subr.mxu0 0.0
  %84 = vmatpush1.msra.mxu0 0.0
  %85 = vmatprep.subr.mxu0 0.0
  %86 = vmatpush1.msra.mxu0 0.0
  %87 = vmatprep.subr.mxu0 0.0
  %88 = vmatpush1.msra.mxu0 0.0
  %89 = vmatprep.subr.mxu0 0.0
  %90 = vmatpush1.msra.mxu0 0.0
  %91 = vmatprep.mubr.f32.mxu0 0.0
  %92 = vmatmul.mubr.f32.gmra.mrb[0].mxu0 %v25
  %v93 = vpop.f32.mrb[0].mxu0
  %v94 = vadd.f32 %v21, %v93
  %v95 = vpop.f32.mrb[0].mxu0
  %96 = vdwg.mxu0
  %97 = vst [vmem:[%s3] sm:$0xf] %v94
  // Predicated region
  $region14: #{graph_embedding.1} parent=0 // pred_check
    _
  $region15: #{graph_embedding.1} parent=0 // pred_check_branch
    %99 = sbr.rel (0) target = $region17
  $region16: #{graph_embedding.1} parent=0 // pred_region
    _
  $region17: #{graph_embedding.1} parent=0 // pred_fallthru
    _
  // Predicated region
  $region18: #{graph_embedding.1} parent=0 // pred_check
    _
  $region19: #{graph_embedding.1} parent=0 // pred_check_branch
    %101 = sbr.rel (0) target = $region21
  $region20: #{graph_embedding.1} parent=0 // pred_region
    _
  $region21: #{graph_embedding.1} parent=0 // pred_fallthru
    _

</llo_original>
